<compile_context>
chip_gen: v7x
topology: tpu7x:2x2x1
jax: 0.10.0
libtpu: 0.0.40
codegen_flags: <defaults>
</compile_context>

<pallas_src>
import itertools

import numpy as np
import jax
import jax.numpy as jnp
from jax.experimental import pallas as pl
from jax.experimental.pallas import tpu as pltpu

NUM_BOTTLENECK = 256
SUBSAMPLE_NUM = 3


def _round_up(x, m):
    return (x + m - 1) // m * m


def _full_block_spec(shape):
    """Whole-array block for the single-step grid."""
    nd = len(shape)
    return pl.BlockSpec(tuple(shape), lambda i, _nd=nd: (0,) * _nd)


class RelationModuleMultiScalePallas:
    def __init__(self, img_feature_dim, num_frames, num_class, key):
        self.img_feature_dim = img_feature_dim
        self.num_frames = num_frames
        self.num_class = num_class
        self.hidden = NUM_BOTTLENECK

        self.scales = list(range(num_frames, 1, -1))
        self.relations_scales = [
            list(itertools.combinations(range(num_frames), scale))
            for scale in self.scales
        ]
        self.subsample_scales = [
            min(SUBSAMPLE_NUM, len(r)) for r in self.relations_scales
        ]
        self.num_scales = len(self.scales)

        # Lane-friendly padded geometry.  K is padded PER SCALE (not to T*D).
        self.k_pads = [_round_up(s * img_feature_dim, 128) for s in self.scales]
        self.c_pad = _round_up(num_class, 128)

        # Static per-scale frame-index tables (device constants); dynamic
        # sampled relation indices gather into these with jnp.take, so
        # re-sampling per forward never retraces/recompiles.
        self.frame_tables = [
            jnp.asarray(np.array(rels, dtype=np.int32))
            for rels in self.relations_scales
        ]

        # Deterministic synthetic parameters (one 2-layer MLP per scale).
        # Weights bf16 (MXU-native), biases / accumulation f32.
        w1s, b1s, w2s, b2s = [], [], [], []
        for s, scale in enumerate(self.scales):
            k_in = scale * img_feature_dim
            key, k1, k2, k3, k4 = jax.random.split(key, 5)
            w1 = 0.02 * jax.random.normal(k1, (k_in, self.hidden), jnp.float32)
            b1 = 0.02 * jax.random.normal(k2, (1, self.hidden), jnp.float32)
            w2 = 0.02 * jax.random.normal(k3, (self.hidden, num_class), jnp.float32)
            b2 = 0.02 * jax.random.normal(k4, (1, num_class), jnp.float32)
            w1s.append(
                jnp.pad(w1, ((0, self.k_pads[s] - k_in), (0, 0))).astype(jnp.bfloat16))
            b1s.append(b1)
            w2s.append(
                jnp.pad(w2, ((0, 0), (0, self.c_pad - num_class))).astype(jnp.bfloat16))
            b2s.append(b2)

        self.w1_list = w1s                       # S x (K_s_pad, H) bf16 (ragged K)
        self.b1_stack = jnp.stack(b1s)           # (S, 1, H) f32
        self.w2_stack = jnp.stack(w2s)           # (S, H, C_pad) bf16
        self.b2_list = b2s                       # S x (1, C) f32 (for the reference)
        # x-independent second-layer bias: sum_s R_s * b2_s, padded to C_pad.
        b2_tot = sum(float(r) * b for r, b in zip(self.subsample_scales, b2s))
        self.b2_total = jnp.pad(b2_tot, ((0, 0), (0, self.c_pad - num_class)))  # (1, C_pad)

        # Compile once; sampled relation indices are traced data (no retrace).
        self._forward = jax.jit(self._forward_impl)

    # ------------------------------------------------------------------ kernel
    def _build_kernel(self, b_pad):
        S = self.num_scales
        c_pad = self.c_pad
        rsub = tuple(self.subsample_scales)

        def kernel(*refs):
            x_refs = refs[:S]                     # per-scale (R_s*B_pad, K_s_pad) bf16
            w1_refs = refs[S:2 * S]               # per-scale (K_s_pad, H) bf16
            b1_ref, w2_ref, b2t_ref, o_ref = refs[2 * S:2 * S + 4]

            acc = jnp.zeros((b_pad, c_pad), jnp.float32)
            for s in range(S):                    # statically unrolled scale loop
                # First Linear over this scale's (R_s * B_pad) relation rows (MXU).
                h = jnp.dot(x_refs[s][...], w1_refs[s][...],
                            preferred_element_type=jnp.float32)
                h = jnp.maximum(h + b1_ref[s], 0.0)          # ReLU(x W1 + b1), f32
                # Sum over sampled relations BEFORE the second Linear (it is
                # linear): static sublane-aligned slices -> cheap VPU adds, and
                # the second matmul shrinks by a factor R_s.
                g = h[0:b_pad]
                for r in range(1, rsub[s]):
                    g = g + h[r * b_pad:(r + 1) * b_pad]
                acc = acc + jnp.dot(g.astype(jnp.bfloat16), w2_ref[s],
                                    preferred_element_type=jnp.float32)
            # Single lane-dense (B_pad, C_pad) f32 output block.
            o_ref[...] = acc + b2t_ref[...]

        return kernel

    def _run_fused(self, x_scales, b_pad):
        operands = list(x_scales) + list(self.w1_list) + [
            self.b1_stack, self.w2_stack, self.b2_total]
        in_specs = [_full_block_spec(a.shape) for a in operands]
        return pl.pallas_call(
            self._build_kernel(b_pad),
            out_shape=jax.ShapeDtypeStruct((b_pad, self.c_pad), jnp.float32),
            grid_spec=pltpu.PrefetchScalarGridSpec(
                num_scalar_prefetch=0,
                grid=(1,),                         # single step: everything VMEM-resident
                in_specs=in_specs,
                out_specs=_full_block_spec((b_pad, self.c_pad)),
            ),
            compiler_params=pltpu.CompilerParams(
                dimension_semantics=("arbitrary",),
                vmem_limit_bytes=32 * 1024 * 1024,  # explicit budget (v7x: 64 MiB phys)
            ),
        )(*operands)

    # ------------------------------------------------- gather / padding (JAX glue)
    def _build_x_scales(self, x, chosen, b_pad):
        B = x.shape[0]
        D = self.img_feature_dim
        # Pre-apply ReLU and cast to bf16 once; XLA fuses this into the gathers.
        xr = jnp.maximum(x, 0.0).astype(jnp.bfloat16)                       # (B, T, D)
        out = []
        for s, scale in enumerate(self.scales):
            r_s = self.subsample_scales[s]
            rel_frames = jnp.take(self.frame_tables[s], chosen[s], axis=0)  # (R_s, scale)
            g = jnp.take(xr, rel_frames.reshape(-1), axis=1)                # (B, R_s*scale, D)
            g = g.reshape(B, r_s, scale * D)
            g = jnp.transpose(g, (1, 0, 2))                                 # (R_s, B, K_s)
            g = jnp.pad(g, ((0, 0), (0, b_pad - B),
                            (0, self.k_pads[s] - scale * D)))
            out.append(g.reshape(r_s * b_pad, self.k_pads[s]))              # bf16
        return out

    # ------------------------------------------------------------------ forward
    def _forward_impl(self, x, chosen):
        B = x.shape[0]
        b_pad = _round_up(max(B, 16), 16)   # bf16 LHS rows pack 16 per sublane-vreg
        # TODO(synk): at production TRN sizes (D a multiple of 128) the relation
        # gather itself could move in-kernel via scalar-prefetched frame tables
        # to avoid materializing the relation-expanded slab in HBM at all.
        x_scales = self._build_x_scales(x, chosen, b_pad)
        y = self._run_fused(x_scales, b_pad)                 # (B_pad, C_pad) f32
        return y[:B, :self.num_class]

    def sample_relations(self, rng):
        """Per-forward relation subsampling (host RNG, mirrors torch np.random.choice)."""
        chosen = []
        for s in range(self.num_scales):
            n_rel = len(self.relations_scales[s])
            r_s = self.subsample_scales[s]
            if s == 0:
                idx = np.zeros((r_s,), np.int32)  # scale == num_frames: single full relation
            else:
                idx = rng.choice(n_rel, r_s, replace=False).astype(np.int32)
            chosen.append(jnp.asarray(idx))
        return tuple(chosen)

    def __call__(self, x, rng):
        # Relation indices are traced data, so per-forward resampling reuses
        # the same compiled program.
        return self._forward(x, self.sample_relations(rng))

    # ---------------- pure-JAX reference (same bf16 casts / same math order) ----------------
    def reference(self, x, chosen):
        B = x.shape[0]
        D = self.img_feature_dim
        xr = jnp.maximum(x, 0.0).astype(jnp.bfloat16)
        b2_tot = sum(float(r) * b for r, b in zip(self.subsample_scales, self.b2_list))
        out = jnp.broadcast_to(b2_tot, (B, self.num_class)).astype(jnp.float32)
        for s, scale in enumerate(self.scales):
            r_s = self.subsample_scales[s]
            rel_frames = jnp.take(self.frame_tables[s], chosen[s], axis=0)
            g = jnp.take(xr, rel_frames.reshape(-1), axis=1)
            g = g.reshape(B, r_s, scale * D)
            w1 = self.w1_list[s][:scale * D]                  # bf16, non-padded rows
            h = jnp.einsum("brk,kh->brh", g, w1,
                           preferred_element_type=jnp.float32) + self.b1_stack[s]
            h = jnp.maximum(h, 0.0)
            gsum = jnp.sum(h, axis=1)                         # (B, H) f32
            out = out + jnp.dot(gsum.astype(jnp.bfloat16),
                                self.w2_stack[s][:, :self.num_class],
                                preferred_element_type=jnp.float32)
        return out


if __name__ == "__main__":
    # Small shapes consistent with the module's forward.
    B, T, D, C = 2, 4, 32, 16   # batch, num_frames, img_feature_dim, num_class

    key = jax.random.PRNGKey(0)
    key, pkey, xkey = jax.random.split(key, 3)

    module = RelationModuleMultiScalePallas(img_feature_dim=D, num_frames=T,
                                            num_class=C, key=pkey)
    x = jax.random.normal(xkey, (B, T, D), jnp.float32)

    # Pallas forward with deterministic relation subsampling.
    rng = np.random.RandomState(0)
    chosen = module.sample_relations(rng)
    out = jax.block_until_ready(module._forward(x, chosen))

    # Pure-JAX reference on the exact same sampled relations.
    ref = module.reference(x, chosen)
    np.testing.assert_allclose(np.asarray(out), np.asarray(ref),
                               rtol=2e-2, atol=2e-3)

    # Re-sampling relations reuses the same compiled program.
    out2 = jax.block_until_ready(module(x, rng))
    assert out2.shape == (B, C)

    print("KERNEL_OK")
</pallas_src>

<mosaic_0001>
module attributes {stable_mosaic.version = 11 : i64} {
  func.func @kernel(%arg0: i32, %arg1: memref<16x128xbf16, #tpu.memory_space<vmem>>, %arg2: memref<48x128xbf16, #tpu.memory_space<vmem>>, %arg3: memref<48x128xbf16, #tpu.memory_space<vmem>>, %arg4: memref<128x256xbf16, #tpu.memory_space<vmem>>, %arg5: memref<128x256xbf16, #tpu.memory_space<vmem>>, %arg6: memref<128x256xbf16, #tpu.memory_space<vmem>>, %arg7: memref<3x1x256xf32, #tpu.memory_space<vmem>>, %arg8: memref<3x256x128xbf16, #tpu.memory_space<vmem>>, %arg9: memref<1x128xf32, #tpu.memory_space<vmem>>, %arg10: memref<16x128xf32, #tpu.memory_space<vmem>>) attributes {dimension_semantics = [#tpu.dimension_semantics<arbitrary>], iteration_bounds = array<i64: 1>, scalar_prefetch = 0 : i64, scratch_operands = 0 : i64, tpu.core_type = #tpu.core_type<tc>, window_params = [{pipeline_mode = #tpu.pipeline_mode<synchronous>, transform_indices = @transform_0, window_bounds = array<i64: 16, 128>}, {pipeline_mode = #tpu.pipeline_mode<synchronous>, transform_indices = @transform_1, window_bounds = array<i64: 48, 128>}, {pipeline_mode = #tpu.pipeline_mode<synchronous>, transform_indices = @transform_2, window_bounds = array<i64: 48, 128>}, {pipeline_mode = #tpu.pipeline_mode<synchronous>, transform_indices = @transform_3, window_bounds = array<i64: 128, 256>}, {pipeline_mode = #tpu.pipeline_mode<synchronous>, transform_indices = @transform_4, window_bounds = array<i64: 128, 256>}, {pipeline_mode = #tpu.pipeline_mode<synchronous>, transform_indices = @transform_5, window_bounds = array<i64: 128, 256>}, {pipeline_mode = #tpu.pipeline_mode<synchronous>, transform_indices = @transform_6, window_bounds = array<i64: 3, 1, 256>}, {pipeline_mode = #tpu.pipeline_mode<synchronous>, transform_indices = @transform_7, window_bounds = array<i64: 3, 256, 128>}, {pipeline_mode = #tpu.pipeline_mode<synchronous>, transform_indices = @transform_8, window_bounds = array<i64: 1, 128>}, {pipeline_mode = #tpu.pipeline_mode<synchronous>, transform_indices = @transform_9, window_bounds = array<i64: 16, 128>}]} {
    %cst = arith.constant 0.000000e+00 : f32
    %0 = vector.broadcast %cst : f32 to vector<16x128xf32>
    %c0 = arith.constant 0 : index
    %c0_0 = arith.constant 0 : index
    %1 = vector.load %arg1[%c0, %c0_0] : memref<16x128xbf16, #tpu.memory_space<vmem>>, vector<16x128xbf16>
    %c0_1 = arith.constant 0 : index
    %c0_2 = arith.constant 0 : index
    %2 = vector.load %arg4[%c0_1, %c0_2] : memref<128x256xbf16, #tpu.memory_space<vmem>>, vector<128x256xbf16>
    %cst_3 = arith.constant dense<0.000000e+00> : vector<16x256xf32>
    %3 = tpu.matmul %1, %2, %cst_3 {dimension_numbers = #tpu.dot_dimension_numbers<[1], [0], [0], [1], [0, 0, 1, 1], [], []>} : vector<16x128xbf16>, vector<128x256xbf16>, vector<16x256xf32> -> vector<16x256xf32>
    %c0_4 = arith.constant 0 : index
    %c0_5 = arith.constant 0 : index
    %c0_6 = arith.constant 0 : index
    %4 = vector.load %arg7[%c0_4, %c0_5, %c0_6] : memref<3x1x256xf32, #tpu.memory_space<vmem>>, vector<1x1x256xf32>
    %5 = vector.shape_cast %4 : vector<1x1x256xf32> to vector<1x256xf32>
    %6 = vector.broadcast %5 : vector<1x256xf32> to vector<16x256xf32>
    %7 = arith.addf %3, %6 : vector<16x256xf32>
    %cst_7 = arith.constant 0.000000e+00 : f32
    %8 = vector.broadcast %cst_7 : f32 to vector<16x256xf32>
    %9 = arith.maximumf %7, %8 : vector<16x256xf32>
    %10 = arith.truncf %9 : vector<16x256xf32> to vector<16x256xbf16>
    %c0_8 = arith.constant 0 : index
    %c0_9 = arith.constant 0 : index
    %c0_10 = arith.constant 0 : index
    %11 = vector.load %arg8[%c0_8, %c0_9, %c0_10] : memref<3x256x128xbf16, #tpu.memory_space<vmem>>, vector<1x256x128xbf16>
    %12 = vector.shape_cast %11 : vector<1x256x128xbf16> to vector<256x128xbf16>
    %cst_11 = arith.constant dense<0.000000e+00> : vector<16x128xf32>
    %13 = tpu.matmul %10, %12, %cst_11 {dimension_numbers = #tpu.dot_dimension_numbers<[1], [0], [0], [1], [0, 0, 1, 1], [], []>} : vector<16x256xbf16>, vector<256x128xbf16>, vector<16x128xf32> -> vector<16x128xf32>
    %14 = arith.addf %0, %13 : vector<16x128xf32>
    %c0_12 = arith.constant 0 : index
    %c0_13 = arith.constant 0 : index
    %15 = vector.load %arg2[%c0_12, %c0_13] : memref<48x128xbf16, #tpu.memory_space<vmem>>, vector<48x128xbf16>
    %c0_14 = arith.constant 0 : index
    %c0_15 = arith.constant 0 : index
    %16 = vector.load %arg5[%c0_14, %c0_15] : memref<128x256xbf16, #tpu.memory_space<vmem>>, vector<128x256xbf16>
    %cst_16 = arith.constant dense<0.000000e+00> : vector<48x256xf32>
    %17 = tpu.matmul %15, %16, %cst_16 {dimension_numbers = #tpu.dot_dimension_numbers<[1], [0], [0], [1], [0, 0, 1, 1], [], []>} : vector<48x128xbf16>, vector<128x256xbf16>, vector<48x256xf32> -> vector<48x256xf32>
    %c1 = arith.constant 1 : index
    %c0_17 = arith.constant 0 : index
    %c0_18 = arith.constant 0 : index
    %18 = vector.load %arg7[%c1, %c0_17, %c0_18] : memref<3x1x256xf32, #tpu.memory_space<vmem>>, vector<1x1x256xf32>
    %19 = vector.shape_cast %18 : vector<1x1x256xf32> to vector<1x256xf32>
    %20 = vector.broadcast %19 : vector<1x256xf32> to vector<48x256xf32>
    %21 = arith.addf %17, %20 : vector<48x256xf32>
    %cst_19 = arith.constant 0.000000e+00 : f32
    %22 = vector.broadcast %cst_19 : f32 to vector<48x256xf32>
    %23 = arith.maximumf %21, %22 : vector<48x256xf32>
    %24 = vector.extract_strided_slice %23 {offsets = [0, 0], sizes = [16, 256], strides = [1, 1]} : vector<48x256xf32> to vector<16x256xf32>
    %25 = vector.extract_strided_slice %23 {offsets = [16, 0], sizes = [16, 256], strides = [1, 1]} : vector<48x256xf32> to vector<16x256xf32>
    %26 = arith.addf %24, %25 : vector<16x256xf32>
    %27 = vector.extract_strided_slice %23 {offsets = [32, 0], sizes = [16, 256], strides = [1, 1]} : vector<48x256xf32> to vector<16x256xf32>
    %28 = arith.addf %26, %27 : vector<16x256xf32>
    %29 = arith.truncf %28 : vector<16x256xf32> to vector<16x256xbf16>
    %c1_20 = arith.constant 1 : index
    %c0_21 = arith.constant 0 : index
    %c0_22 = arith.constant 0 : index
    %30 = vector.load %arg8[%c1_20, %c0_21, %c0_22] : memref<3x256x128xbf16, #tpu.memory_space<vmem>>, vector<1x256x128xbf16>
    %31 = vector.shape_cast %30 : vector<1x256x128xbf16> to vector<256x128xbf16>
    %cst_23 = arith.constant dense<0.000000e+00> : vector<16x128xf32>
    %32 = tpu.matmul %29, %31, %cst_23 {dimension_numbers = #tpu.dot_dimension_numbers<[1], [0], [0], [1], [0, 0, 1, 1], [], []>} : vector<16x256xbf16>, vector<256x128xbf16>, vector<16x128xf32> -> vector<16x128xf32>
    %33 = arith.addf %14, %32 : vector<16x128xf32>
    %c0_24 = arith.constant 0 : index
    %c0_25 = arith.constant 0 : index
    %34 = vector.load %arg3[%c0_24, %c0_25] : memref<48x128xbf16, #tpu.memory_space<vmem>>, vector<48x128xbf16>
    %c0_26 = arith.constant 0 : index
    %c0_27 = arith.constant 0 : index
    %35 = vector.load %arg6[%c0_26, %c0_27] : memref<128x256xbf16, #tpu.memory_space<vmem>>, vector<128x256xbf16>
    %cst_28 = arith.constant dense<0.000000e+00> : vector<48x256xf32>
    %36 = tpu.matmul %34, %35, %cst_28 {dimension_numbers = #tpu.dot_dimension_numbers<[1], [0], [0], [1], [0, 0, 1, 1], [], []>} : vector<48x128xbf16>, vector<128x256xbf16>, vector<48x256xf32> -> vector<48x256xf32>
    %c2 = arith.constant 2 : index
    %c0_29 = arith.constant 0 : index
    %c0_30 = arith.constant 0 : index
    %37 = vector.load %arg7[%c2, %c0_29, %c0_30] : memref<3x1x256xf32, #tpu.memory_space<vmem>>, vector<1x1x256xf32>
    %38 = vector.shape_cast %37 : vector<1x1x256xf32> to vector<1x256xf32>
    %39 = vector.broadcast %38 : vector<1x256xf32> to vector<48x256xf32>
    %40 = arith.addf %36, %39 : vector<48x256xf32>
    %cst_31 = arith.constant 0.000000e+00 : f32
    %41 = vector.broadcast %cst_31 : f32 to vector<48x256xf32>
    %42 = arith.maximumf %40, %41 : vector<48x256xf32>
    %43 = vector.extract_strided_slice %42 {offsets = [0, 0], sizes = [16, 256], strides = [1, 1]} : vector<48x256xf32> to vector<16x256xf32>
    %44 = vector.extract_strided_slice %42 {offsets = [16, 0], sizes = [16, 256], strides = [1, 1]} : vector<48x256xf32> to vector<16x256xf32>
    %45 = arith.addf %43, %44 : vector<16x256xf32>
    %46 = vector.extract_strided_slice %42 {offsets = [32, 0], sizes = [16, 256], strides = [1, 1]} : vector<48x256xf32> to vector<16x256xf32>
    %47 = arith.addf %45, %46 : vector<16x256xf32>
    %48 = arith.truncf %47 : vector<16x256xf32> to vector<16x256xbf16>
    %c2_32 = arith.constant 2 : index
    %c0_33 = arith.constant 0 : index
    %c0_34 = arith.constant 0 : index
    %49 = vector.load %arg8[%c2_32, %c0_33, %c0_34] : memref<3x256x128xbf16, #tpu.memory_space<vmem>>, vector<1x256x128xbf16>
    %50 = vector.shape_cast %49 : vector<1x256x128xbf16> to vector<256x128xbf16>
    %cst_35 = arith.constant dense<0.000000e+00> : vector<16x128xf32>
    %51 = tpu.matmul %48, %50, %cst_35 {dimension_numbers = #tpu.dot_dimension_numbers<[1], [0], [0], [1], [0, 0, 1, 1], [], []>} : vector<16x256xbf16>, vector<256x128xbf16>, vector<16x128xf32> -> vector<16x128xf32>
    %52 = arith.addf %33, %51 : vector<16x128xf32>
    %c0_36 = arith.constant 0 : index
    %c0_37 = arith.constant 0 : index
    %53 = vector.load %arg9[%c0_36, %c0_37] : memref<1x128xf32, #tpu.memory_space<vmem>>, vector<1x128xf32>
    %54 = vector.broadcast %53 : vector<1x128xf32> to vector<16x128xf32>
    %55 = arith.addf %52, %54 : vector<16x128xf32>
    %c0_38 = arith.constant 0 : index
    %c0_39 = arith.constant 0 : index
    %56 = vector.load %arg10[%c0_38, %c0_39] : memref<16x128xf32, #tpu.memory_space<vmem>>, vector<16x128xf32>
    tpu.vector_store %arg10[%c0_38, %c0_39], %55 {strides = array<i32>} : memref<16x128xf32, #tpu.memory_space<vmem>>, vector<16x128xf32>,
    return
  }
  func.func @transform_0(%arg0: i32) -> (i32, i32) {
    %c0_i32 = arith.constant 0 : i32
    %c0_i32_0 = arith.constant 0 : i32
    %c0_i32_1 = arith.constant 0 : i32
    return %c0_i32, %c0_i32_0 : i32, i32
  }
  func.func @transform_1(%arg0: i32) -> (i32, i32) {
    %c0_i32 = arith.constant 0 : i32
    %c0_i32_0 = arith.constant 0 : i32
    %c0_i32_1 = arith.constant 0 : i32
    return %c0_i32, %c0_i32_0 : i32, i32
  }
  func.func @transform_2(%arg0: i32) -> (i32, i32) {
    %c0_i32 = arith.constant 0 : i32
    %c0_i32_0 = arith.constant 0 : i32
    %c0_i32_1 = arith.constant 0 : i32
    return %c0_i32, %c0_i32_0 : i32, i32
  }
  func.func @transform_3(%arg0: i32) -> (i32, i32) {
    %c0_i32 = arith.constant 0 : i32
    %c0_i32_0 = arith.constant 0 : i32
    %c0_i32_1 = arith.constant 0 : i32
    return %c0_i32, %c0_i32_0 : i32, i32
  }
  func.func @transform_4(%arg0: i32) -> (i32, i32) {
    %c0_i32 = arith.constant 0 : i32
    %c0_i32_0 = arith.constant 0 : i32
    %c0_i32_1 = arith.constant 0 : i32
    return %c0_i32, %c0_i32_0 : i32, i32
  }
  func.func @transform_5(%arg0: i32) -> (i32, i32) {
    %c0_i32 = arith.constant 0 : i32
    %c0_i32_0 = arith.constant 0 : i32
    %c0_i32_1 = arith.constant 0 : i32
    return %c0_i32, %c0_i32_0 : i32, i32
  }
  func.func @transform_6(%arg0: i32) -> (i32, i32, i32) {
    %c0_i32 = arith.constant 0 : i32
    %c0_i32_0 = arith.constant 0 : i32
    %c0_i32_1 = arith.constant 0 : i32
    %c0_i32_2 = arith.constant 0 : i32
    return %c0_i32, %c0_i32_0, %c0_i32_1 : i32, i32, i32
  }
  func.func @transform_7(%arg0: i32) -> (i32, i32, i32) {
    %c0_i32 = arith.constant 0 : i32
    %c0_i32_0 = arith.constant 0 : i32
    %c0_i32_1 = arith.constant 0 : i32
    %c0_i32_2 = arith.constant 0 : i32
    return %c0_i32, %c0_i32_0, %c0_i32_1 : i32, i32, i32
  }
  func.func @transform_8(%arg0: i32) -> (i32, i32) {
    %c0_i32 = arith.constant 0 : i32
    %c0_i32_0 = arith.constant 0 : i32
    %c0_i32_1 = arith.constant 0 : i32
    return %c0_i32, %c0_i32_0 : i32, i32
  }
  func.func @transform_9(%arg0: i32) -> (i32, i32) {
    %c0_i32 = arith.constant 0 : i32
    %c0_i32_0 = arith.constant 0 : i32
    %c0_i32_1 = arith.constant 0 : i32
    return %c0_i32, %c0_i32_0 : i32, i32
  }
}

</mosaic_0001>

<llo_original>
// kernel: _forward_impl.1
$region0: #{_forward_impl.1}
  #allocation0 [shape = 'u32[]', space=smem, size = 0x4, offset = 0x4, fixed_abs, tag = 'smem constant byte address 0x4 - core index']
  #allocation1 [shape = 'u32[144,128]{1,0:T(1,128)}', space=vmem, size = 0x12000, scoped, tag = 'internal scratch']
  %s0 = inlined_call_operand.vmem [shape: bf16[16,128], index: 0, kind: input, shape index: {}]
  %s1 = inlined_call_operand.vmem [shape: bf16[48,128], index: 1, kind: input, shape index: {}]
  %s2 = inlined_call_operand.vmem [shape: bf16[48,128], index: 2, kind: input, shape index: {}]
  %s3 = inlined_call_operand.vmem [shape: bf16[128,256], index: 3, kind: input, shape index: {}]
  %s4 = inlined_call_operand.vmem [shape: bf16[128,256], index: 4, kind: input, shape index: {}]
  %s5 = inlined_call_operand.vmem [shape: bf16[128,256], index: 5, kind: input, shape index: {}]
  %s6 = inlined_call_operand.vmem [shape: f32[3,1,256], index: 6, kind: input, shape index: {}]
  %s7 = inlined_call_operand.vmem [shape: bf16[3,256,128], index: 7, kind: input, shape index: {}]
  %s8 = inlined_call_operand.vmem [shape: f32[1,128], index: 8, kind: input, shape index: {}]
  %s9 = inlined_call_operand.vmem [shape: f32[16,128], index: 9, kind: output, shape index: {}]
  %s10 = sld [smem:[#allocation0]]
  $region46: #{_forward_impl.1} parent=0
    _
  %s12 = ssub.s32 1, %s10
  %s13 = scalar_select 0, %s12, %s10
  // Predicated region
  $region2: #{_forward_impl.1} parent=0 // pred_check
    _
  $region3: #{_forward_impl.1} parent=0 // pred_check_branch
    %15 = sbr.rel (0) target = $region5
  $region4: #{_forward_impl.1} parent=0 // pred_region
    _
  $region5: #{_forward_impl.1} parent=0 // pred_fallthru
    _
  // Predicated region
  $region6: #{_forward_impl.1} parent=0 // pred_check
    _
  $region7: #{_forward_impl.1} parent=0 // pred_check_branch
    %17 = sbr.rel (0) target = $region9
  $region8: #{_forward_impl.1} parent=0 // pred_region
    _
  $region9: #{_forward_impl.1} parent=0 // pred_fallthru
    _
  // Predicated region
  $region10: #{_forward_impl.1} parent=0 // pred_check
    _
  $region11: #{_forward_impl.1} parent=0 // pred_check_branch
    %19 = sbr.rel (0) target = $region13
  $region12: #{_forward_impl.1} parent=0 // pred_region
    _
  $region13: #{_forward_impl.1} parent=0 // pred_fallthru
    _
  // Predicated region
  $region14: #{_forward_impl.1} parent=0 // pred_check
    _
  $region15: #{_forward_impl.1} parent=0 // pred_check_branch
    %21 = sbr.rel (0) target = $region17
  $region16: #{_forward_impl.1} parent=0 // pred_region
    _
  $region17: #{_forward_impl.1} parent=0 // pred_fallthru
    _
  // Predicated region
  $region18: #{_forward_impl.1} parent=0 // pred_check
    _
  $region19: #{_forward_impl.1} parent=0 // pred_check_branch
    %23 = sbr.rel (0) target = $region21
  $region20: #{_forward_impl.1} parent=0 // pred_region
    _
  $region21: #{_forward_impl.1} parent=0 // pred_fallthru
    _
  // Predicated region
  $region22: #{_forward_impl.1} parent=0 // pred_check
    _
  $region23: #{_forward_impl.1} parent=0 // pred_check_branch
    %25 = sbr.rel (0) target = $region25
  $region24: #{_forward_impl.1} parent=0 // pred_region
    _
  $region25: #{_forward_impl.1} parent=0 // pred_fallthru
    _
  // Predicated region
  $region26: #{_forward_impl.1} parent=0 // pred_check
    _
  $region27: #{_forward_impl.1} parent=0 // pred_check_branch
    %27 = sbr.rel (0) target = $region29
  $region28: #{_forward_impl.1} parent=0 // pred_region
    _
  $region29: #{_forward_impl.1} parent=0 // pred_fallthru
    _
  // Predicated region
  $region30: #{_forward_impl.1} parent=0 // pred_check
    _
  $region31: #{_forward_impl.1} parent=0 // pred_check_branch
    %29 = sbr.rel (0) target = $region33
  $region32: #{_forward_impl.1} parent=0 // pred_region
    _
  $region33: #{_forward_impl.1} parent=0 // pred_fallthru
    _
  // Predicated region
  $region34: #{_forward_impl.1} parent=0 // pred_check
    _
  $region35: #{_forward_impl.1} parent=0 // pred_check_branch
    %31 = sbr.rel (0) target = $region37
  $region36: #{_forward_impl.1} parent=0 // pred_region
    _
  $region37: #{_forward_impl.1} parent=0 // pred_fallthru
    _
  %v33 = vld [vmem:[%s0] sm:$0xf]
  %v34 = vld [vmem:[%s0 + $0x4] sm:$0xf]
  %v35 = vld [vmem:[%s3] sm:$0xff]
  %v36 = vld [vmem:[%s3 + $0x8] sm:$0xff]
  %v37 = vld [vmem:[%s3 + $0x10] sm:$0xff]
  %v38 = vld [vmem:[%s3 + $0x18] sm:$0xff]
  %v39 = vld [vmem:[%s3 + $0x20] sm:$0xff]
  %v40 = vld [vmem:[%s3 + $0x28] sm:$0xff]
  %v41 = vld [vmem:[%s3 + $0x30] sm:$0xff]
  %v42 = vld [vmem:[%s3 + $0x38] sm:$0xff]
  %v43 = vld [vmem:[%s3 + $0x40] sm:$0xff]
  %v44 = vld [vmem:[%s3 + $0x48] sm:$0xff]
  %v45 = vld [vmem:[%s3 + $0x50] sm:$0xff]
  %v46 = vld [vmem:[%s3 + $0x58] sm:$0xff]
  %v47 = vld [vmem:[%s3 + $0x60] sm:$0xff]
  %v48 = vld [vmem:[%s3 + $0x68] sm:$0xff]
  %v49 = vld [vmem:[%s3 + $0x70] sm:$0xff]
  %v50 = vld [vmem:[%s3 + $0x78] sm:$0xff]
  %v51 = vld [vmem:[%s6] sm:$0x3]
  %v53 = vlaneseq
  %v54 = vshrl.u32 %v53, 7
  %v55 = vsub.s32 0, %v54
  %v56 = vrot.slane %v51, %v55
  %v57 = vlaneseq
  %v58 = vshrl.u32 %v57, 7
  %v59 = vsub.s32 1, %v58
  %v60 = vrot.slane %v51, %v59
  %v65 = vunpack.c.l.b16 %v33
  %v66 = vunpack.c.l.b16 %v34
  %v67 = vpack.c.b16 %v66, %v65
  %v85 = vunpack.c.l.b16 %v35
  %v86 = vunpack.c.h.b16 %v35
  %v87 = vunpack.c.l.b16 %v36
  %v88 = vunpack.c.h.b16 %v36
  %v89 = vunpack.c.l.b16 %v37
  %v90 = vunpack.c.h.b16 %v37
  %v91 = vunpack.c.l.b16 %v38
  %v92 = vunpack.c.h.b16 %v38
  %v93 = vunpack.c.l.b16 %v39
  %v94 = vunpack.c.h.b16 %v39
  %v95 = vunpack.c.l.b16 %v40
  %v96 = vunpack.c.h.b16 %v40
  %v97 = vunpack.c.l.b16 %v41
  %v98 = vunpack.c.h.b16 %v41
  %v99 = vunpack.c.l.b16 %v42
  %v100 = vunpack.c.h.b16 %v42
  %v101 = vunpack.c.l.b16 %v43
  %v102 = vunpack.c.h.b16 %v43
  %v103 = vunpack.c.l.b16 %v44
  %v104 = vunpack.c.h.b16 %v44
  %v105 = vunpack.c.l.b16 %v45
  %v106 = vunpack.c.h.b16 %v45
  %v107 = vunpack.c.l.b16 %v46
  %v108 = vunpack.c.h.b16 %v46
  %v109 = vunpack.c.l.b16 %v47
  %v110 = vunpack.c.h.b16 %v47
  %v111 = vunpack.c.l.b16 %v48
  %v112 = vunpack.c.h.b16 %v48
  %v113 = vunpack.c.l.b16 %v49
  %v114 = vunpack.c.h.b16 %v49
  %v115 = vunpack.c.l.b16 %v50
  %v116 = vunpack.c.h.b16 %v50
  %v117 = vpack.c.b16 %v87, %v85
  %v118 = vpack.c.b16 %v88, %v86
  %v119 = vpack.c.b16 %v91, %v89
  %v120 = vpack.c.b16 %v92, %v90
  %v121 = vpack.c.b16 %v95, %v93
  %v122 = vpack.c.b16 %v96, %v94
  %v123 = vpack.c.b16 %v99, %v97
  %v124 = vpack.c.b16 %v100, %v98
  %v125 = vpack.c.b16 %v103, %v101
  %v126 = vpack.c.b16 %v104, %v102
  %v127 = vpack.c.b16 %v107, %v105
  %v128 = vpack.c.b16 %v108, %v106
  %v129 = vpack.c.b16 %v111, %v109
  %v130 = vpack.c.b16 %v112, %v110
  %v131 = vpack.c.b16 %v115, %v113
  %v132 = vpack.c.b16 %v116, %v114
  %149 = vmatprep.subr.bf16.mxu0 %v118
  %150 = vmatpush1.bf16.msra.mxu0 %v117
  %151 = vmatprep.subr.bf16.mxu0 %v120
  %152 = vmatpush1.bf16.msra.mxu0 %v119
  %153 = vmatprep.subr.bf16.mxu0 %v122
  %154 = vmatpush1.bf16.msra.mxu0 %v121
  %155 = vmatprep.subr.bf16.mxu0 %v124
  %156 = vmatpush1.bf16.msra.mxu0 %v123
  %157 = vmatprep.subr.bf16.mxu0 %v126
  %158 = vmatpush1.bf16.msra.mxu0 %v125
  %159 = vmatprep.subr.bf16.mxu0 %v128
  %160 = vmatpush1.bf16.msra.mxu0 %v127
  %161 = vmatprep.subr.bf16.mxu0 %v130
  %162 = vmatpush1.bf16.msra.mxu0 %v129
  %163 = vmatprep.subr.bf16.mxu0 %v132
  %164 = vmatpush1.bf16.msra.mxu0 %v131
  %165 = vmatprep.subr.bf16.mxu0 0
  %166 = vmatpush1.bf16.msra.mxu0 0
  %167 = vmatprep.subr.bf16.mxu0 0
  %168 = vmatpush1.bf16.msra.mxu0 0
  %169 = vmatprep.subr.bf16.mxu0 0
  %170 = vmatpush1.bf16.msra.mxu0 0
  %171 = vmatprep.subr.bf16.mxu0 0
  %172 = vmatpush1.bf16.msra.mxu0 0
  %173 = vmatprep.subr.bf16.mxu0 0
  %174 = vmatpush1.bf16.msra.mxu0 0
  %175 = vmatprep.subr.bf16.mxu0 0
  %176 = vmatpush1.bf16.msra.mxu0 0
  %177 = vmatprep.subr.bf16.mxu0 0
  %178 = vmatpush1.bf16.msra.mxu0 0
  %179 = vmatprep.subr.bf16.mxu0 0
  %180 = vmatpush1.bf16.msra.mxu0 0
  %181 = vmatprep.mubr.bf16.mxu0 0
  %182 = vmatmul.mubr.bf16.gmra.mrb[0].mxu0 %v67
  %v183 = vpop.f32.mrb[0].mxu0
  %v184 = vadd.f32 %v56, %v183
  %v185 = vpop.f32.mrb[0].mxu0
  %v186 = vadd.f32 %v60, %v185
  %v187 = vpop.f32.mrb[0].mxu0
  %v188 = vadd.f32 %v56, %v187
  %v189 = vpop.f32.mrb[0].mxu0
  %v190 = vadd.f32 %v60, %v189
  %191 = vdwg.mxu0
  %v192 = vmax.f32 %v184, 0.0
  %v193 = vmax.f32 %v186, 0.0
  %v194 = vmax.f32 %v188, 0.0
  %v195 = vmax.f32 %v190, 0.0
  %v196 = vpack.c.bf16 %v194, %v192
  %v197 = vpack.c.bf16 %v195, %v193
  %v198 = vld [vmem:[%s7] sm:$0xf]
  %v199 = vld [vmem:[%s7 + $0x4] sm:$0xf]
  %v200 = vld [vmem:[%s7 + $0x8] sm:$0xf]
  %v201 = vld [vmem:[%s7 + $0xc] sm:$0xf]
  %v202 = vld [vmem:[%s7 + $0x10] sm:$0xf]
  %v203 = vld [vmem:[%s7 + $0x14] sm:$0xf]
  %v204 = vld [vmem:[%s7 + $0x18] sm:$0xf]
  %v205 = vld [vmem:[%s7 + $0x1c] sm:$0xf]
  %v206 = vld [vmem:[%s7 + $0x20] sm:$0xf]
  %v207 = vld [vmem:[%s7 + $0x24] sm:$0xf]
  %v208 = vld [vmem:[%s7 + $0x28] sm:$0xf]
  %v209 = vld [vmem:[%s7 + $0x2c] sm:$0xf]
  %v210 = vld [vmem:[%s7 + $0x30] sm:$0xf]
  %v211 = vld [vmem:[%s7 + $0x34] sm:$0xf]
  %v212 = vld [vmem:[%s7 + $0x38] sm:$0xf]
  %v213 = vld [vmem:[%s7 + $0x3c] sm:$0xf]
  %v214 = vld [vmem:[%s7 + $0x40] sm:$0xf]
  %v215 = vld [vmem:[%s7 + $0x44] sm:$0xf]
  %v216 = vld [vmem:[%s7 + $0x48] sm:$0xf]
  %v217 = vld [vmem:[%s7 + $0x4c] sm:$0xf]
  %v218 = vld [vmem:[%s7 + $0x50] sm:$0xf]
  %v219 = vld [vmem:[%s7 + $0x54] sm:$0xf]
  %v220 = vld [vmem:[%s7 + $0x58] sm:$0xf]
  %v221 = vld [vmem:[%s7 + $0x5c] sm:$0xf]
  %v222 = vld [vmem:[%s7 + $0x60] sm:$0xf]
  %v223 = vld [vmem:[%s7 + $0x64] sm:$0xf]
  %v224 = vld [vmem:[%s7 + $0x68] sm:$0xf]
  %v225 = vld [vmem:[%s7 + $0x6c] sm:$0xf]
  %v226 = vld [vmem:[%s7 + $0x70] sm:$0xf]
  %v227 = vld [vmem:[%s7 + $0x74] sm:$0xf]
  %v228 = vld [vmem:[%s7 + $0x78] sm:$0xf]
  %v229 = vld [vmem:[%s7 + $0x7c] sm:$0xf]
  %v230 = vld [vmem:[%s1] sm:$0xf]
  %v231 = vld [vmem:[%s1 + $0x4] sm:$0xf]
  %v232 = vld [vmem:[%s1 + $0x8] sm:$0xf]
  %v233 = vld [vmem:[%s1 + $0xc] sm:$0xf]
  %v234 = vld [vmem:[%s1 + $0x10] sm:$0xf]
  %v235 = vld [vmem:[%s1 + $0x14] sm:$0xf]
  %v236 = vld [vmem:[%s4] sm:$0xff]
  %v237 = vld [vmem:[%s4 + $0x8] sm:$0xff]
  %v238 = vld [vmem:[%s4 + $0x10] sm:$0xff]
  %v239 = vld [vmem:[%s4 + $0x18] sm:$0xff]
  %v240 = vld [vmem:[%s4 + $0x20] sm:$0xff]
  %v241 = vld [vmem:[%s4 + $0x28] sm:$0xff]
  %v242 = vld [vmem:[%s4 + $0x30] sm:$0xff]
  %v243 = vld [vmem:[%s4 + $0x38] sm:$0xff]
  %v244 = vld [vmem:[%s4 + $0x40] sm:$0xff]
  %v245 = vld [vmem:[%s4 + $0x48] sm:$0xff]
  %v246 = vld [vmem:[%s4 + $0x50] sm:$0xff]
  %v247 = vld [vmem:[%s4 + $0x58] sm:$0xff]
  %v248 = vld [vmem:[%s4 + $0x60] sm:$0xff]
  %v249 = vld [vmem:[%s4 + $0x68] sm:$0xff]
  %v250 = vld [vmem:[%s4 + $0x70] sm:$0xff]
  %v251 = vld [vmem:[%s4 + $0x78] sm:$0xff]
  %s252 = scalar_lea.vmem %s6, 2
  %v253 = vld [vmem:[%s252] sm:$0x3]
  %v255 = vlaneseq
  %v256 = vshrl.u32 %v255, 7
  %v257 = vsub.s32 0, %v256
  %v258 = vrot.slane %v253, %v257
  %v259 = vlaneseq
  %v260 = vshrl.u32 %v259, 7
  %v261 = vsub.s32 1, %v260
  %v262 = vrot.slane %v253, %v261
  %v271 = vunpack.c.l.b16 %v230
  %v272 = vunpack.c.l.b16 %v231
  %v273 = vunpack.c.l.b16 %v232
  %v274 = vunpack.c.l.b16 %v233
  %v275 = vunpack.c.l.b16 %v234
  %v276 = vunpack.c.l.b16 %v235
  %v277 = vpack.c.b16 %v272, %v271
  %v278 = vpack.c.b16 %v274, %v273
  %v279 = vpack.c.b16 %v276, %v275
  %v299 = vunpack.c.l.b16 %v236
  %v300 = vunpack.c.h.b16 %v236
  %v301 = vunpack.c.l.b16 %v237
  %v302 = vunpack.c.h.b16 %v237
  %v303 = vunpack.c.l.b16 %v238
  %v304 = vunpack.c.h.b16 %v238
  %v305 = vunpack.c.l.b16 %v239
  %v306 = vunpack.c.h.b16 %v239
  %v307 = vunpack.c.l.b16 %v240
  %v308 = vunpack.c.h.b16 %v240
  %v309 = vunpack.c.l.b16 %v241
  %v310 = vunpack.c.h.b16 %v241
  %v311 = vunpack.c.l.b16 %v242
  %v312 = vunpack.c.h.b16 %v242
  %v313 = vunpack.c.l.b16 %v243
  %v314 = vunpack.c.h.b16 %v243
  %v315 = vunpack.c.l.b16 %v244
  %v316 = vunpack.c.h.b16 %v244
  %v317 = vunpack.c.l.b16 %v245
  %v318 = vunpack.c.h.b16 %v245
  %v319 = vunpack.c.l.b16 %v246
  %v320 = vunpack.c.h.b16 %v246
  %v321 = vunpack.c.l.b16 %v247
  %v322 = vunpack.c.h.b16 %v247
  %v323 = vunpack.c.l.b16 %v248
  %v324 = vunpack.c.h.b16 %v248
  %v325 = vunpack.c.l.b16 %v249
  %v326 = vunpack.c.h.b16 %v249
  %v327 = vunpack.c.l.b16 %v250
  %v328 = vunpack.c.h.b16 %v250
  %v329 = vunpack.c.l.b16 %v251
  %v330 = vunpack.c.h.b16 %v251
  %v331 = vpack.c.b16 %v301, %v299
  %v332 = vpack.c.b16 %v302, %v300
  %v333 = vpack.c.b16 %v305, %v303
  %v334 = vpack.c.b16 %v306, %v304
  %v335 = vpack.c.b16 %v309, %v307
  %v336 = vpack.c.b16 %v310, %v308
  %v337 = vpack.c.b16 %v313, %v311
  %v338 = vpack.c.b16 %v314, %v312
  %v339 = vpack.c.b16 %v317, %v315
  %v340 = vpack.c.b16 %v318, %v316
  %v341 = vpack.c.b16 %v321, %v319
  %v342 = vpack.c.b16 %v322, %v320
  %v343 = vpack.c.b16 %v325, %v323
  %v344 = vpack.c.b16 %v326, %v324
  %v345 = vpack.c.b16 %v329, %v327
  %v346 = vpack.c.b16 %v330, %v328
  %363 = vmatprep.subr.bf16.mxu0 %v332
  %364 = vmatpush1.bf16.msra.mxu0 %v331
  %365 = vmatprep.subr.bf16.mxu0 %v334
  %366 = vmatpush1.bf16.msra.mxu0 %v333
  %367 = vmatprep.subr.bf16.mxu0 %v336
  %368 = vmatpush1.bf16.msra.mxu0 %v335
  %369 = vmatprep.subr.bf16.mxu0 %v338
  %370 = vmatpush1.bf16.msra.mxu0 %v337
  %371 = vmatprep.subr.bf16.mxu0 %v340
  %372 = vmatpush1.bf16.msra.mxu0 %v339
  %373 = vmatprep.subr.bf16.mxu0 %v342
  %374 = vmatpush1.bf16.msra.mxu0 %v341
  %375 = vmatprep.subr.bf16.mxu0 %v344
  %376 = vmatpush1.bf16.msra.mxu0 %v343
  %377 = vmatprep.subr.bf16.mxu0 %v346
  %378 = vmatpush1.bf16.msra.mxu0 %v345
  %379 = vmatprep.subr.bf16.mxu0 0
  %380 = vmatpush1.bf16.msra.mxu0 0
  %381 = vmatprep.subr.bf16.mxu0 0
  %382 = vmatpush1.bf16.msra.mxu0 0
  %383 = vmatprep.subr.bf16.mxu0 0
  %384 = vmatpush1.bf16.msra.mxu0 0
  %385 = vmatprep.subr.bf16.mxu0 0
  %386 = vmatpush1.bf16.msra.mxu0 0
  %387 = vmatprep.subr.bf16.mxu0 0
  %388 = vmatpush1.bf16.msra.mxu0 0
  %389 = vmatprep.subr.bf16.mxu0 0
  %390 = vmatpush1.bf16.msra.mxu0 0
  %391 = vmatprep.subr.bf16.mxu0 0
  %392 = vmatpush1.bf16.msra.mxu0 0
  %393 = vmatprep.subr.bf16.mxu0 0
  %394 = vmatpush1.bf16.msra.mxu0 0
  %395 = vmatprep.mubr.bf16.mxu0 0
  %396 = vmatmul.mubr.bf16.gmra.mrb[0].mxu0 %v277
  %v397 = vpop.f32.mrb[0].mxu0
  %v398 = vadd.f32 %v258, %v397
  %v399 = vpop.f32.mrb[0].mxu0
  %v400 = vadd.f32 %v262, %v399
  %v401 = vpop.f32.mrb[0].mxu0
  %v402 = vadd.f32 %v258, %v401
  %v403 = vpop.f32.mrb[0].mxu0
  %v404 = vadd.f32 %v262, %v403
  %405 = vmatprep.mubr.bf16.mxu0 0
  %406 = vmatmul.mubr.bf16.gmra.mrb[0].mxu0 %v278
  %v407 = vpop.f32.mrb[0].mxu0
  %v408 = vadd.f32 %v258, %v407
  %v409 = vpop.f32.mrb[0].mxu0
  %v410 = vadd.f32 %v262, %v409
  %v411 = vpop.f32.mrb[0].mxu0
  %v412 = vadd.f32 %v258, %v411
  %v413 = vpop.f32.mrb[0].mxu0
  %v414 = vadd.f32 %v262, %v413
  %415 = vmatprep.mubr.bf16.mxu0 0
  %416 = vmatmul.mubr.bf16.gmra.mrb[0].mxu0 %v279
  %v417 = vpop.f32.mrb[0].mxu0
  %v418 = vadd.f32 %v258, %v417
  %v419 = vpop.f32.mrb[0].mxu0
  %v420 = vadd.f32 %v262, %v419
  %v421 = vpop.f32.mrb[0].mxu0
  %v422 = vadd.f32 %v258, %v421
  %v423 = vpop.f32.mrb[0].mxu0
  %v424 = vadd.f32 %v262, %v423
  %425 = vdwg.mxu0
  %v426 = vmax.f32 %v398, 0.0
  %v427 = vmax.f32 %v400, 0.0
  %v428 = vmax.f32 %v402, 0.0
  %v429 = vmax.f32 %v404, 0.0
  %v430 = vmax.f32 %v408, 0.0
  %v431 = vmax.f32 %v410, 0.0
  %v432 = vmax.f32 %v412, 0.0
  %v433 = vmax.f32 %v414, 0.0
  %v434 = vmax.f32 %v418, 0.0
  %v435 = vmax.f32 %v420, 0.0
  %v436 = vmax.f32 %v422, 0.0
  %v437 = vmax.f32 %v424, 0.0
  %v438 = vadd.f32 %v426, %v430
  %v439 = vadd.f32 %v427, %v431
  %v440 = vadd.f32 %v428, %v432
  %v441 = vadd.f32 %v429, %v433
  %v442 = vadd.f32 %v438, %v434
  %v443 = vadd.f32 %v439, %v435
  %v444 = vadd.f32 %v440, %v436
  %v445 = vadd.f32 %v441, %v437
  %v446 = vpack.c.bf16 %v444, %v442
  %v447 = vpack.c.bf16 %v445, %v443
  %s448 = scalar_lea.vmem %s7, 128
  %v449 = vld [vmem:[%s448] sm:$0xf]
  %v450 = vld [vmem:[%s448 + $0x4] sm:$0xf]
  %v451 = vld [vmem:[%s448 + $0x8] sm:$0xf]
  %v452 = vld [vmem:[%s448 + $0xc] sm:$0xf]
  %v453 = vld [vmem:[%s448 + $0x10] sm:$0xf]
  %v454 = vld [vmem:[%s448 + $0x14] sm:$0xf]
  %v455 = vld [vmem:[%s448 + $0x18] sm:$0xf]
  %v456 = vld [vmem:[%s448 + $0x1c] sm:$0xf]
  %v457 = vld [vmem:[%s448 + $0x20] sm:$0xf]
  %v458 = vld [vmem:[%s448 + $0x24] sm:$0xf]
  %v459 = vld [vmem:[%s448 + $0x28] sm:$0xf]
  %v460 = vld [vmem:[%s448 + $0x2c] sm:$0xf]
  %v461 = vld [vmem:[%s448 + $0x30] sm:$0xf]
  %v462 = vld [vmem:[%s448 + $0x34] sm:$0xf]
  %v463 = vld [vmem:[%s448 + $0x38] sm:$0xf]
  %v464 = vld [vmem:[%s448 + $0x3c] sm:$0xf]
  %v465 = vld [vmem:[%s448 + $0x40] sm:$0xf]
  %v466 = vld [vmem:[%s448 + $0x44] sm:$0xf]
  %v467 = vld [vmem:[%s448 + $0x48] sm:$0xf]
  %v468 = vld [vmem:[%s448 + $0x4c] sm:$0xf]
  %v469 = vld [vmem:[%s448 + $0x50] sm:$0xf]
  %v470 = vld [vmem:[%s448 + $0x54] sm:$0xf]
  %v471 = vld [vmem:[%s448 + $0x58] sm:$0xf]
  %v472 = vld [vmem:[%s448 + $0x5c] sm:$0xf]
  %v473 = vld [vmem:[%s448 + $0x60] sm:$0xf]
  %v474 = vld [vmem:[%s448 + $0x64] sm:$0xf]
  %v475 = vld [vmem:[%s448 + $0x68] sm:$0xf]
  %v476 = vld [vmem:[%s448 + $0x6c] sm:$0xf]
  %v477 = vld [vmem:[%s448 + $0x70] sm:$0xf]
  %v478 = vld [vmem:[%s448 + $0x74] sm:$0xf]
  %v479 = vld [vmem:[%s448 + $0x78] sm:$0xf]
  %v480 = vld [vmem:[%s448 + $0x7c] sm:$0xf]
  %v513 = vunpack.c.l.b16 %v449
  %v514 = vunpack.c.l.b16 %v450
  %v515 = vunpack.c.l.b16 %v451
  %v516 = vunpack.c.l.b16 %v452
  %v517 = vunpack.c.l.b16 %v453
  %v518 = vunpack.c.l.b16 %v454
  %v519 = vunpack.c.l.b16 %v455
  %v520 = vunpack.c.l.b16 %v456
  %v521 = vunpack.c.l.b16 %v457
  %v522 = vunpack.c.l.b16 %v458
  %v523 = vunpack.c.l.b16 %v459
  %v524 = vunpack.c.l.b16 %v460
  %v525 = vunpack.c.l.b16 %v461
  %v526 = vunpack.c.l.b16 %v462
  %v527 = vunpack.c.l.b16 %v463
  %v528 = vunpack.c.l.b16 %v464
  %v529 = vunpack.c.l.b16 %v465
  %v530 = vunpack.c.l.b16 %v466
  %v531 = vunpack.c.l.b16 %v467
  %v532 = vunpack.c.l.b16 %v468
  %v533 = vunpack.c.l.b16 %v469
  %v534 = vunpack.c.l.b16 %v470
  %v535 = vunpack.c.l.b16 %v471
  %v536 = vunpack.c.l.b16 %v472
  %v537 = vunpack.c.l.b16 %v473
  %v538 = vunpack.c.l.b16 %v474
  %v539 = vunpack.c.l.b16 %v475
  %v540 = vunpack.c.l.b16 %v476
  %v541 = vunpack.c.l.b16 %v477
  %v542 = vunpack.c.l.b16 %v478
  %v543 = vunpack.c.l.b16 %v479
  %v544 = vunpack.c.l.b16 %v480
  %v545 = vpack.c.b16 %v514, %v513
  %v546 = vpack.c.b16 %v516, %v515
  %v547 = vpack.c.b16 %v518, %v517
  %v548 = vpack.c.b16 %v520, %v519
  %v549 = vpack.c.b16 %v522, %v521
  %v550 = vpack.c.b16 %v524, %v523
  %v551 = vpack.c.b16 %v526, %v525
  %v552 = vpack.c.b16 %v528, %v527
  %v553 = vpack.c.b16 %v530, %v529
  %v554 = vpack.c.b16 %v532, %v531
  %v555 = vpack.c.b16 %v534, %v533
  %v556 = vpack.c.b16 %v536, %v535
  %v557 = vpack.c.b16 %v538, %v537
  %v558 = vpack.c.b16 %v540, %v539
  %v559 = vpack.c.b16 %v542, %v541
  %v560 = vpack.c.b16 %v544, %v543
  %577 = vmatprep.subr.bf16.mxu0 0
  %578 = vmatpush1.bf16.msra.mxu0 %v545
  %579 = vmatprep.subr.bf16.mxu0 0
  %580 = vmatpush1.bf16.msra.mxu0 %v546
  %581 = vmatprep.subr.bf16.mxu0 0
  %582 = vmatpush1.bf16.msra.mxu0 %v547
  %583 = vmatprep.subr.bf16.mxu0 0
  %584 = vmatpush1.bf16.msra.mxu0 %v548
  %585 = vmatprep.subr.bf16.mxu0 0
  %586 = vmatpush1.bf16.msra.mxu0 %v549
  %587 = vmatprep.subr.bf16.mxu0 0
  %588 = vmatpush1.bf16.msra.mxu0 %v550
  %589 = vmatprep.subr.bf16.mxu0 0
  %590 = vmatpush1.bf16.msra.mxu0 %v551
  %591 = vmatprep.subr.bf16.mxu0 0
  %592 = vmatpush1.bf16.msra.mxu0 %v552
  %593 = vmatprep.subr.bf16.mxu0 0
  %594 = vmatpush1.bf16.msra.mxu0 %v553
  %595 = vmatprep.subr.bf16.mxu0 0
  %596 = vmatpush1.bf16.msra.mxu0 %v554
  %597 = vmatprep.subr.bf16.mxu0 0
  %598 = vmatpush1.bf16.msra.mxu0 %v555
  %599 = vmatprep.subr.bf16.mxu0 0
  %600 = vmatpush1.bf16.msra.mxu0 %v556
  %601 = vmatprep.subr.bf16.mxu0 0
  %602 = vmatpush1.bf16.msra.mxu0 %v557
  %603 = vmatprep.subr.bf16.mxu0 0
  %604 = vmatpush1.bf16.msra.mxu0 %v558
  %605 = vmatprep.subr.bf16.mxu0 0
  %606 = vmatpush1.bf16.msra.mxu0 %v559
  %607 = vmatprep.subr.bf16.mxu0 0
  %608 = vmatpush1.bf16.msra.mxu0 %v560
  %609 = vmatprep.mubr.bf16.mxu0 %v447
  %610 = vmatmul.mubr.bf16.gmra.mrb[0].mxu0 %v446
  %v611 = vpop.f32.mrb[0].mxu0
  %v612 = vadd.f32 0.0, %v611
  %v613 = vpop.f32.mrb[0].mxu0
  %v614 = vpop.f32.mrb[0].mxu0
  %v615 = vadd.f32 0.0, %v614
  %v616 = vpop.f32.mrb[0].mxu0
  %617 = vdwg.mxu0
  %v650 = vunpack.c.l.b16 %v198
  %v651 = vunpack.c.l.b16 %v199
  %v652 = vunpack.c.l.b16 %v200
  %v653 = vunpack.c.l.b16 %v201
  %v654 = vunpack.c.l.b16 %v202
  %v655 = vunpack.c.l.b16 %v203
  %v656 = vunpack.c.l.b16 %v204
  %v657 = vunpack.c.l.b16 %v205
  %v658 = vunpack.c.l.b16 %v206
  %v659 = vunpack.c.l.b16 %v207
  %v660 = vunpack.c.l.b16 %v208
  %v661 = vunpack.c.l.b16 %v209
  %v662 = vunpack.c.l.b16 %v210
  %v663 = vunpack.c.l.b16 %v211
  %v664 = vunpack.c.l.b16 %v212
  %v665 = vunpack.c.l.b16 %v213
  %v666 = vunpack.c.l.b16 %v214
  %v667 = vunpack.c.l.b16 %v215
  %v668 = vunpack.c.l.b16 %v216
  %v669 = vunpack.c.l.b16 %v217
  %v670 = vunpack.c.l.b16 %v218
  %v671 = vunpack.c.l.b16 %v219
  %v672 = vunpack.c.l.b16 %v220
  %v673 = vunpack.c.l.b16 %v221
  %v674 = vunpack.c.l.b16 %v222
  %v675 = vunpack.c.l.b16 %v223
  %v676 = vunpack.c.l.b16 %v224
  %v677 = vunpack.c.l.b16 %v225
  %v678 = vunpack.c.l.b16 %v226
  %v679 = vunpack.c.l.b16 %v227
  %v680 = vunpack.c.l.b16 %v228
  %v681 = vunpack.c.l.b16 %v229
  %v682 = vpack.c.b16 %v651, %v650
  %v683 = vpack.c.b16 %v653, %v652
  %v684 = vpack.c.b16 %v655, %v654
  %v685 = vpack.c.b16 %v657, %v656
  %v686 = vpack.c.b16 %v659, %v658
  %v687 = vpack.c.b16 %v661, %v660
  %v688 = vpack.c.b16 %v663, %v662
  %v689 = vpack.c.b16 %v665, %v664
  %v690 = vpack.c.b16 %v667, %v666
  %v691 = vpack.c.b16 %v669, %v668
  %v692 = vpack.c.b16 %v671, %v670
  %v693 = vpack.c.b16 %v673, %v672
  %v694 = vpack.c.b16 %v675, %v674
  %v695 = vpack.c.b16 %v677, %v676
  %v696 = vpack.c.b16 %v679, %v678
  %v697 = vpack.c.b16 %v681, %v680
  %714 = vmatprep.subr.bf16.mxu0 0
  %715 = vmatpush1.bf16.msra.mxu0 %v682
  %716 = vmatprep.subr.bf16.mxu0 0
  %717 = vmatpush1.bf16.msra.mxu0 %v683
  %718 = vmatprep.subr.bf16.mxu0 0
  %719 = vmatpush1.bf16.msra.mxu0 %v684
  %720 = vmatprep.subr.bf16.mxu0 0
  %721 = vmatpush1.bf16.msra.mxu0 %v685
  %722 = vmatprep.subr.bf16.mxu0 0
  %723 = vmatpush1.bf16.msra.mxu0 %v686
  %724 = vmatprep.subr.bf16.mxu0 0
  %725 = vmatpush1.bf16.msra.mxu0 %v687
  %726 = vmatprep.subr.bf16.mxu0 0
  %727 = vmatpush1.bf16.msra.mxu0 %v688
  %728 = vmatprep.subr.bf16.mxu0 0
  %729 = vmatpush1.bf16.msra.mxu0 %v689
  %730 = vmatprep.subr.bf16.mxu0 0
  %731 = vmatpush1.bf16.msra.mxu0 %v690
  %732 = vmatprep.subr.bf16.mxu0 0
  %733 = vmatpush1.bf16.msra.mxu0 %v691
  %734 = vmatprep.subr.bf16.mxu0 0
  %735 = vmatpush1.bf16.msra.mxu0 %v692
  %736 = vmatprep.subr.bf16.mxu0 0
  %737 = vmatpush1.bf16.msra.mxu0 %v693
  %738 = vmatprep.subr.bf16.mxu0 0
  %739 = vmatpush1.bf16.msra.mxu0 %v694
  %740 = vmatprep.subr.bf16.mxu0 0
  %741 = vmatpush1.bf16.msra.mxu0 %v695
  %742 = vmatprep.subr.bf16.mxu0 0
  %743 = vmatpush1.bf16.msra.mxu0 %v696
  %744 = vmatprep.subr.bf16.mxu0 0
  %745 = vmatpush1.bf16.msra.mxu0 %v697
  %746 = vmatprep.mubr.bf16.mxu0 %v197
  %747 = vmatmul.mubr.bf16.gmra.mrb[0].mxu0 %v196
  %v748 = vpop.f32.mrb[0].mxu0
  %v749 = vadd.f32 %v612, %v748
  %v750 = vpop.f32.mrb[0].mxu0
  %v751 = vpop.f32.mrb[0].mxu0
  %v752 = vadd.f32 %v615, %v751
  %v753 = vpop.f32.mrb[0].mxu0
  %754 = vdwg.mxu0
  %v755 = vld [vmem:[%s2] sm:$0xf]
  %v756 = vld [vmem:[%s2 + $0x4] sm:$0xf]
  %v757 = vld [vmem:[%s2 + $0x8] sm:$0xf]
  %v758 = vld [vmem:[%s2 + $0xc] sm:$0xf]
  %v759 = vld [vmem:[%s2 + $0x10] sm:$0xf]
  %v760 = vld [vmem:[%s2 + $0x14] sm:$0xf]
  %v761 = vld [vmem:[%s5] sm:$0xff]
  %v762 = vld [vmem:[%s5 + $0x8] sm:$0xff]
  %v763 = vld [vmem:[%s5 + $0x10] sm:$0xff]
  %v764 = vld [vmem:[%s5 + $0x18] sm:$0xff]
  %v765 = vld [vmem:[%s5 + $0x20] sm:$0xff]
  %v766 = vld [vmem:[%s5 + $0x28] sm:$0xff]
  %v767 = vld [vmem:[%s5 + $0x30] sm:$0xff]
  %v768 = vld [vmem:[%s5 + $0x38] sm:$0xff]
  %v769 = vld [vmem:[%s5 + $0x40] sm:$0xff]
  %v770 = vld [vmem:[%s5 + $0x48] sm:$0xff]
  %v771 = vld [vmem:[%s5 + $0x50] sm:$0xff]
  %v772 = vld [vmem:[%s5 + $0x58] sm:$0xff]
  %v773 = vld [vmem:[%s5 + $0x60] sm:$0xff]
  %v774 = vld [vmem:[%s5 + $0x68] sm:$0xff]
  %v775 = vld [vmem:[%s5 + $0x70] sm:$0xff]
  %v776 = vld [vmem:[%s5 + $0x78] sm:$0xff]
  %s777 = scalar_lea.vmem %s6, 4
  %v778 = vld [vmem:[%s777] sm:$0x3]
  %v780 = vlaneseq
  %v781 = vshrl.u32 %v780, 7
  %v782 = vsub.s32 0, %v781
  %v783 = vrot.slane %v778, %v782
  %v784 = vlaneseq
  %v785 = vshrl.u32 %v784, 7
  %v786 = vsub.s32 1, %v785
  %v787 = vrot.slane %v778, %v786
  %v796 = vunpack.c.l.b16 %v755
  %v797 = vunpack.c.l.b16 %v756
  %v798 = vunpack.c.l.b16 %v757
  %v799 = vunpack.c.l.b16 %v758
  %v800 = vunpack.c.l.b16 %v759
  %v801 = vunpack.c.l.b16 %v760
  %v802 = vpack.c.b16 %v797, %v796
  %v803 = vpack.c.b16 %v799, %v798
  %v804 = vpack.c.b16 %v801, %v800
  %v824 = vunpack.c.l.b16 %v761
  %v825 = vunpack.c.h.b16 %v761
  %v826 = vunpack.c.l.b16 %v762
  %v827 = vunpack.c.h.b16 %v762
  %v828 = vunpack.c.l.b16 %v763
  %v829 = vunpack.c.h.b16 %v763
  %v830 = vunpack.c.l.b16 %v764
  %v831 = vunpack.c.h.b16 %v764
  %v832 = vunpack.c.l.b16 %v765
  %v833 = vunpack.c.h.b16 %v765
  %v834 = vunpack.c.l.b16 %v766
  %v835 = vunpack.c.h.b16 %v766
  %v836 = vunpack.c.l.b16 %v767
  %v837 = vunpack.c.h.b16 %v767
  %v838 = vunpack.c.l.b16 %v768
  %v839 = vunpack.c.h.b16 %v768
  %v840 = vunpack.c.l.b16 %v769
  %v841 = vunpack.c.h.b16 %v769
  %v842 = vunpack.c.l.b16 %v770
  %v843 = vunpack.c.h.b16 %v770
  %v844 = vunpack.c.l.b16 %v771
  %v845 = vunpack.c.h.b16 %v771
  %v846 = vunpack.c.l.b16 %v772
  %v847 = vunpack.c.h.b16 %v772
  %v848 = vunpack.c.l.b16 %v773
  %v849 = vunpack.c.h.b16 %v773
  %v850 = vunpack.c.l.b16 %v774
  %v851 = vunpack.c.h.b16 %v774
  %v852 = vunpack.c.l.b16 %v775
  %v853 = vunpack.c.h.b16 %v775
  %v854 = vunpack.c.l.b16 %v776
  %v855 = vunpack.c.h.b16 %v776
  %v856 = vpack.c.b16 %v826, %v824
  %v857 = vpack.c.b16 %v827, %v825
  %v858 = vpack.c.b16 %v830, %v828
  %v859 = vpack.c.b16 %v831, %v829
  %v860 = vpack.c.b16 %v834, %v832
  %v861 = vpack.c.b16 %v835, %v833
  %v862 = vpack.c.b16 %v838, %v836
  %v863 = vpack.c.b16 %v839, %v837
  %v864 = vpack.c.b16 %v842, %v840
  %v865 = vpack.c.b16 %v843, %v841
  %v866 = vpack.c.b16 %v846, %v844
  %v867 = vpack.c.b16 %v847, %v845
  %v868 = vpack.c.b16 %v850, %v848
  %v869 = vpack.c.b16 %v851, %v849
  %v870 = vpack.c.b16 %v854, %v852
  %v871 = vpack.c.b16 %v855, %v853
  %888 = vmatprep.subr.bf16.mxu0 %v857
  %889 = vmatpush1.bf16.msra.mxu0 %v856
  %890 = vmatprep.subr.bf16.mxu0 %v859
  %891 = vmatpush1.bf16.msra.mxu0 %v858
  %892 = vmatprep.subr.bf16.mxu0 %v861
  %893 = vmatpush1.bf16.msra.mxu0 %v860
  %894 = vmatprep.subr.bf16.mxu0 %v863
  %895 = vmatpush1.bf16.msra.mxu0 %v862
  %896 = vmatprep.subr.bf16.mxu0 %v865
  %897 = vmatpush1.bf16.msra.mxu0 %v864
  %898 = vmatprep.subr.bf16.mxu0 %v867
  %899 = vmatpush1.bf16.msra.mxu0 %v866
  %900 = vmatprep.subr.bf16.mxu0 %v869
  %901 = vmatpush1.bf16.msra.mxu0 %v868
  %902 = vmatprep.subr.bf16.mxu0 %v871
  %903 = vmatpush1.bf16.msra.mxu0 %v870
  %904 = vmatprep.subr.bf16.mxu0 0
  %905 = vmatpush1.bf16.msra.mxu0 0
  %906 = vmatprep.subr.bf16.mxu0 0
  %907 = vmatpush1.bf16.msra.mxu0 0
  %908 = vmatprep.subr.bf16.mxu0 0
  %909 = vmatpush1.bf16.msra.mxu0 0
  %910 = vmatprep.subr.bf16.mxu0 0
  %911 = vmatpush1.bf16.msra.mxu0 0
  %912 = vmatprep.subr.bf16.mxu0 0
  %913 = vmatpush1.bf16.msra.mxu0 0
  %914 = vmatprep.subr.bf16.mxu0 0
  %915 = vmatpush1.bf16.msra.mxu0 0
  %916 = vmatprep.subr.bf16.mxu0 0
  %917 = vmatpush1.bf16.msra.mxu0 0
  %918 = vmatprep.subr.bf16.mxu0 0
  %919 = vmatpush1.bf16.msra.mxu0 0
  %920 = vmatprep.mubr.bf16.mxu0 0
  %921 = vmatmul.mubr.bf16.gmra.mrb[0].mxu0 %v802
  %v922 = vpop.f32.mrb[0].mxu0
  %v923 = vadd.f32 %v783, %v922
  %v924 = vpop.f32.mrb[0].mxu0
  %v925 = vadd.f32 %v787, %v924
  %v926 = vpop.f32.mrb[0].mxu0
  %v927 = vadd.f32 %v783, %v926
  %v928 = vpop.f32.mrb[0].mxu0
  %v929 = vadd.f32 %v787, %v928
  %930 = vmatprep.mubr.bf16.mxu0 0
  %931 = vmatmul.mubr.bf16.gmra.mrb[0].mxu0 %v803
  %v932 = vpop.f32.mrb[0].mxu0
  %v933 = vadd.f32 %v783, %v932
  %v934 = vpop.f32.mrb[0].mxu0
  %v935 = vadd.f32 %v787, %v934
  %v936 = vpop.f32.mrb[0].mxu0
  %v937 = vadd.f32 %v783, %v936
  %v938 = vpop.f32.mrb[0].mxu0
  %v939 = vadd.f32 %v787, %v938
  %940 = vmatprep.mubr.bf16.mxu0 0
  %941 = vmatmul.mubr.bf16.gmra.mrb[0].mxu0 %v804
  %v942 = vpop.f32.mrb[0].mxu0
  %v943 = vadd.f32 %v783, %v942
  %v944 = vpop.f32.mrb[0].mxu0
  %v945 = vadd.f32 %v787, %v944
  %v946 = vpop.f32.mrb[0].mxu0
  %v947 = vadd.f32 %v783, %v946
  %v948 = vpop.f32.mrb[0].mxu0
  %v949 = vadd.f32 %v787, %v948
  %950 = vdwg.mxu0
  %v951 = vmax.f32 %v923, 0.0
  %v952 = vmax.f32 %v925, 0.0
  %v953 = vmax.f32 %v927, 0.0
  %v954 = vmax.f32 %v929, 0.0
  %v955 = vmax.f32 %v933, 0.0
  %v956 = vmax.f32 %v935, 0.0
  %v957 = vmax.f32 %v937, 0.0
  %v958 = vmax.f32 %v939, 0.0
  %v959 = vmax.f32 %v943, 0.0
  %v960 = vmax.f32 %v945, 0.0
  %v961 = vmax.f32 %v947, 0.0
  %v962 = vmax.f32 %v949, 0.0
  %v963 = vadd.f32 %v951, %v955
  %v964 = vadd.f32 %v952, %v956
  %v965 = vadd.f32 %v953, %v957
  %v966 = vadd.f32 %v954, %v958
  %v967 = vadd.f32 %v963, %v959
  %v968 = vadd.f32 %v964, %v960
  %v969 = vadd.f32 %v965, %v961
  %v970 = vadd.f32 %v966, %v962
  %v971 = vpack.c.bf16 %v969, %v967
  %v972 = vpack.c.bf16 %v970, %v968
  %s973 = scalar_lea.vmem %s7, 256
  %v974 = vld [vmem:[%s973] sm:$0xf]
  %v975 = vld [vmem:[%s973 + $0x4] sm:$0xf]
  %v976 = vld [vmem:[%s973 + $0x8] sm:$0xf]
  %v977 = vld [vmem:[%s973 + $0xc] sm:$0xf]
  %v978 = vld [vmem:[%s973 + $0x10] sm:$0xf]
  %v979 = vld [vmem:[%s973 + $0x14] sm:$0xf]
  %v980 = vld [vmem:[%s973 + $0x18] sm:$0xf]
  %v981 = vld [vmem:[%s973 + $0x1c] sm:$0xf]
  %v982 = vld [vmem:[%s973 + $0x20] sm:$0xf]
  %v983 = vld [vmem:[%s973 + $0x24] sm:$0xf]
  %v984 = vld [vmem:[%s973 + $0x28] sm:$0xf]
  %v985 = vld [vmem:[%s973 + $0x2c] sm:$0xf]
  %v986 = vld [vmem:[%s973 + $0x30] sm:$0xf]
  %v987 = vld [vmem:[%s973 + $0x34] sm:$0xf]
  %v988 = vld [vmem:[%s973 + $0x38] sm:$0xf]
  %v989 = vld [vmem:[%s973 + $0x3c] sm:$0xf]
  %v990 = vld [vmem:[%s973 + $0x40] sm:$0xf]
  %v991 = vld [vmem:[%s973 + $0x44] sm:$0xf]
  %v992 = vld [vmem:[%s973 + $0x48] sm:$0xf]
  %v993 = vld [vmem:[%s973 + $0x4c] sm:$0xf]
  %v994 = vld [vmem:[%s973 + $0x50] sm:$0xf]
  %v995 = vld [vmem:[%s973 + $0x54] sm:$0xf]
  %v996 = vld [vmem:[%s973 + $0x58] sm:$0xf]
  %v997 = vld [vmem:[%s973 + $0x5c] sm:$0xf]
  %v998 = vld [vmem:[%s973 + $0x60] sm:$0xf]
  %v999 = vld [vmem:[%s973 + $0x64] sm:$0xf]
  %v1000 = vld [vmem:[%s973 + $0x68] sm:$0xf]
  %v1001 = vld [vmem:[%s973 + $0x6c] sm:$0xf]
  %v1002 = vld [vmem:[%s973 + $0x70] sm:$0xf]
  %v1003 = vld [vmem:[%s973 + $0x74] sm:$0xf]
  %v1004 = vld [vmem:[%s973 + $0x78] sm:$0xf]
  %v1005 = vld [vmem:[%s973 + $0x7c] sm:$0xf]
  %v1038 = vunpack.c.l.b16 %v974
  %v1039 = vunpack.c.l.b16 %v975
  %v1040 = vunpack.c.l.b16 %v976
  %v1041 = vunpack.c.l.b16 %v977
  %v1042 = vunpack.c.l.b16 %v978
  %v1043 = vunpack.c.l.b16 %v979
  %v1044 = vunpack.c.l.b16 %v980
  %v1045 = vunpack.c.l.b16 %v981
  %v1046 = vunpack.c.l.b16 %v982
  %v1047 = vunpack.c.l.b16 %v983
  %v1048 = vunpack.c.l.b16 %v984
  %v1049 = vunpack.c.l.b16 %v985
  %v1050 = vunpack.c.l.b16 %v986
  %v1051 = vunpack.c.l.b16 %v987
  %v1052 = vunpack.c.l.b16 %v988
  %v1053 = vunpack.c.l.b16 %v989
  %v1054 = vunpack.c.l.b16 %v990
  %v1055 = vunpack.c.l.b16 %v991
  %v1056 = vunpack.c.l.b16 %v992
  %v1057 = vunpack.c.l.b16 %v993
  %v1058 = vunpack.c.l.b16 %v994
  %v1059 = vunpack.c.l.b16 %v995
  %v1060 = vunpack.c.l.b16 %v996
  %v1061 = vunpack.c.l.b16 %v997
  %v1062 = vunpack.c.l.b16 %v998
  %v1063 = vunpack.c.l.b16 %v999
  %v1064 = vunpack.c.l.b16 %v1000
  %v1065 = vunpack.c.l.b16 %v1001
  %v1066 = vunpack.c.l.b16 %v1002
  %v1067 = vunpack.c.l.b16 %v1003
  %v1068 = vunpack.c.l.b16 %v1004
  %v1069 = vunpack.c.l.b16 %v1005
  %v1070 = vpack.c.b16 %v1039, %v1038
  %v1071 = vpack.c.b16 %v1041, %v1040
  %v1072 = vpack.c.b16 %v1043, %v1042
  %v1073 = vpack.c.b16 %v1045, %v1044
  %v1074 = vpack.c.b16 %v1047, %v1046
  %v1075 = vpack.c.b16 %v1049, %v1048
  %v1076 = vpack.c.b16 %v1051, %v1050
  %v1077 = vpack.c.b16 %v1053, %v1052
  %v1078 = vpack.c.b16 %v1055, %v1054
  %v1079 = vpack.c.b16 %v1057, %v1056
  %v1080 = vpack.c.b16 %v1059, %v1058
  %v1081 = vpack.c.b16 %v1061, %v1060
  %v1082 = vpack.c.b16 %v1063, %v1062
  %v1083 = vpack.c.b16 %v1065, %v1064
  %v1084 = vpack.c.b16 %v1067, %v1066
  %v1085 = vpack.c.b16 %v1069, %v1068
  %1102 = vmatprep.subr.bf16.mxu0 0
  %1103 = vmatpush1.bf16.msra.mxu0 %v1070
  %1104 = vmatprep.subr.bf16.mxu0 0
  %1105 = vmatpush1.bf16.msra.mxu0 %v1071
  %1106 = vmatprep.subr.bf16.mxu0 0
  %1107 = vmatpush1.bf16.msra.mxu0 %v1072
  %1108 = vmatprep.subr.bf16.mxu0 0
  %1109 = vmatpush1.bf16.msra.mxu0 %v1073
  %1110 = vmatprep.subr.bf16.mxu0 0
  %1111 = vmatpush1.bf16.msra.mxu0 %v1074
  %1112 = vmatprep.subr.bf16.mxu0 0
  %1113 = vmatpush1.bf16.msra.mxu0 %v1075
  %1114 = vmatprep.subr.bf16.mxu0 0
  %1115 = vmatpush1.bf16.msra.mxu0 %v1076
  %1116 = vmatprep.subr.bf16.mxu0 0
  %1117 = vmatpush1.bf16.msra.mxu0 %v1077
  %1118 = vmatprep.subr.bf16.mxu0 0
  %1119 = vmatpush1.bf16.msra.mxu0 %v1078
  %1120 = vmatprep.subr.bf16.mxu0 0
  %1121 = vmatpush1.bf16.msra.mxu0 %v1079
  %1122 = vmatprep.subr.bf16.mxu0 0
  %1123 = vmatpush1.bf16.msra.mxu0 %v1080
  %1124 = vmatprep.subr.bf16.mxu0 0
  %1125 = vmatpush1.bf16.msra.mxu0 %v1081
  %1126 = vmatprep.subr.bf16.mxu0 0
  %1127 = vmatpush1.bf16.msra.mxu0 %v1082
  %1128 = vmatprep.subr.bf16.mxu0 0
  %1129 = vmatpush1.bf16.msra.mxu0 %v1083
  %1130 = vmatprep.subr.bf16.mxu0 0
  %1131 = vmatpush1.bf16.msra.mxu0 %v1084
  %1132 = vmatprep.subr.bf16.mxu0 0
  %1133 = vmatpush1.bf16.msra.mxu0 %v1085
  %1134 = vmatprep.mubr.bf16.mxu0 %v972
  %1135 = vmatmul.mubr.bf16.gmra.mrb[0].mxu0 %v971
  %v1136 = vpop.f32.mrb[0].mxu0
  %v1137 = vadd.f32 0.0, %v1136
  %v1138 = vpop.f32.mrb[0].mxu0
  %v1139 = vpop.f32.mrb[0].mxu0
  %v1140 = vadd.f32 0.0, %v1139
  %v1141 = vpop.f32.mrb[0].mxu0
  %1142 = vdwg.mxu0
  %v1143 = vadd.f32 %v749, %v1137
  %v1144 = vadd.f32 %v752, %v1140
  %v1145 = vld [vmem:[%s8] sm:$0x1]
  %v1147 = vlaneseq
  %v1148 = vshrl.u32 %v1147, 7
  %v1149 = vsub.s32 0, %v1148
  %v1150 = vrot.slane %v1145, %v1149
  %v1152 = vadd.f32 %v1143, %v1150
  %v1153 = vadd.f32 %v1144, %v1150
  %1154 = vst [vmem:[%s9] sm:$0xff] %v1152
  %1155 = vst [vmem:[%s9 + $0x8] sm:$0xff] %v1153
  // Predicated region
  $region38: #{_forward_impl.1} parent=0 // pred_check
    _
  $region39: #{_forward_impl.1} parent=0 // pred_check_branch
    %1157 = sbr.rel (0) target = $region41
  $region40: #{_forward_impl.1} parent=0 // pred_region
    _
  $region41: #{_forward_impl.1} parent=0 // pred_fallthru
    _
  // Predicated region
  $region42: #{_forward_impl.1} parent=0 // pred_check
    _
  $region43: #{_forward_impl.1} parent=0 // pred_check_branch
    %1159 = sbr.rel (0) target = $region45
  $region44: #{_forward_impl.1} parent=0 // pred_region
    _
  $region45: #{_forward_impl.1} parent=0 // pred_fallthru
    _

</llo_original>
